<compile_context>
chip_gen: v7x
topology: tpu7x:2x2x1
jax: 0.10.0
libtpu: 0.0.40
codegen_flags: <defaults>
</compile_context>

<pallas_src>
import functools

import jax
import jax.numpy as jnp
from jax.experimental import pallas as pl
from jax.experimental.pallas import tpu as pltpu


_LANE = 128


def _vmem_budget():
    """Return (per-slab byte cap, vmem_limit clamp) sized from this chip's VMEM."""
    vmem_cap = 64 * 1024 * 1024  # conservative default == v7x
    try:
        info = pltpu.get_tpu_info()
        cap = getattr(info, "vmem_capacity_bytes", None)
        if cap:
            vmem_cap = int(cap)
    except Exception:
        pass
    if vmem_cap >= 128 * 1024 * 1024:          # v5e / v6e: 128 MiB VMEM
        return 24 * 1024 * 1024, 96 * 1024 * 1024
    return 8 * 1024 * 1024, 48 * 1024 * 1024   # v7x: 64 MiB VMEM


def _accum_chunks(acc_ref, x_ref, n_chunks):
    """acc += sum of n_chunks full 128-lane chunks of the current slab (VPU only)."""
    if n_chunks <= 0:
        return

    def body(j, carry):
        off = pl.multiple_of(j * _LANE, _LANE)
        acc_ref[...] += x_ref[0, :, pl.ds(off, _LANE)].astype(jnp.float32)
        return carry

    jax.lax.fori_loop(0, n_chunks, body, 0, unroll=min(8, n_chunks))


def _pool_sum_kernel(x_ref, o_ref, acc_ref, *, hw, tile):
    # x_ref:   (1, Cin, tile)   one spatial slab of one batch element
    # o_ref:   (1, Cin, 1)      f32 global spatial sum for this batch element
    # acc_ref: (Cin, 128) f32   per-lane partial sums (VMEM scratch)
    s = pl.program_id(1)
    last = pl.num_programs(1) - 1

    @pl.when(s == 0)
    def _init():
        acc_ref[...] = jnp.zeros_like(acc_ref)

    n_full = tile // _LANE     # static: 128-lane chunks in a full slab
    rem = hw % tile            # static: valid lanes in the ragged last slab (0 => none)

    if rem == 0:
        # Every slab is fully in-bounds: pure unmasked streaming adds.
        _accum_chunks(acc_ref, x_ref, n_full)
    else:
        @pl.when(s != last)
        def _full_steps():
            _accum_chunks(acc_ref, x_ref, n_full)

        @pl.when(s == last)
        def _ragged_step():
            # Only `rem` lanes of the boundary slab are defined; the rest of the
            # block is undefined and MUST be excluded from the sum.
            _accum_chunks(acc_ref, x_ref, rem // _LANE)
            tail = rem % _LANE
            if tail:
                off = (rem // _LANE) * _LANE       # static
                chunk = x_ref[0, :, off:off + _LANE].astype(jnp.float32)
                lane = jax.lax.broadcasted_iota(jnp.int32, chunk.shape, 1)
                acc_ref[...] += jnp.where(lane < tail, chunk, 0.0)

    @pl.when(s == last)
    def _finalize():
        # Single cross-lane reduce per batch element; layout-preserving store
        # (Cin stays on sublanes), no per-step relayout.
        o_ref[...] = jnp.sum(acc_ref[...], axis=-1, keepdims=True)[None]


def global_pooling_forward(x, conv_w, bn_gamma, bn_beta, bn_mean, bn_var,
                           eps=1e-5, spatial_tile=None):
    """x: (N, Cin, H, W) NCHW. conv_w: (Cout, Cin, 1, 1). Returns (N, Cout, H, W)."""
    N, Cin, H, W = x.shape
    Cout = conv_w.shape[0]
    hw = H * W
    itemsize = jnp.dtype(x.dtype).itemsize

    slab_cap, vmem_clamp = _vmem_budget()

    # ---- lane-aligned spatial tile derived from the VMEM slab budget ----
    hw_ceil = pl.cdiv(hw, _LANE) * _LANE
    budget_tile = max(_LANE, ((slab_cap // max(1, Cin * itemsize)) // _LANE) * _LANE)
    if spatial_tile is None:
        tile = budget_tile
    else:
        tile = min(max(_LANE, (spatial_tile // _LANE) * _LANE), budget_tile)
    tile = max(_LANE, min(tile, hw_ceil))
    n_sp = pl.cdiv(hw, tile)

    # Free reshape; no padding copy — the ragged tail is masked inside the kernel.
    x_flat = x.reshape(N, Cin, hw)

    in_blk = Cin * tile * itemsize                       # one spatial slab
    need = 2 * in_blk + Cin * _LANE * 4 + (4 << 20)      # double-buffered slabs + acc + headroom
    vmem_limit = int(min(vmem_clamp, max(need, 32 * 1024 * 1024)))

    sums = pl.pallas_call(
        functools.partial(_pool_sum_kernel, hw=hw, tile=tile),
        out_shape=jax.ShapeDtypeStruct((N, Cin, 1), jnp.float32),
        grid_spec=pltpu.PrefetchScalarGridSpec(
            num_scalar_prefetch=0,
            grid=(N, n_sp),
            in_specs=[pl.BlockSpec((1, Cin, tile), lambda n, s: (n, 0, s))],
            out_specs=pl.BlockSpec((1, Cin, 1), lambda n, s: (n, 0, 0)),
            scratch_shapes=[pltpu.VMEM((Cin, _LANE), jnp.float32)],
        ),
        compiler_params=pltpu.CompilerParams(
            dimension_semantics=("parallel", "arbitrary"),
            vmem_limit_bytes=vmem_limit,
        ),
    )(x_flat)

    # ---- hoisted, FLOP-trivial tail: 1x1 conv (matmul) + fused BN + ReLU ----
    # TODO(synk): BatchNorm is folded in inference mode (running stats); training-mode
    # batch statistics are not implemented.
    w2 = jnp.transpose(conv_w.reshape(Cout, Cin)).astype(jnp.float32)        # (Cin, Cout)
    scale = bn_gamma.astype(jnp.float32) / jnp.sqrt(bn_var.astype(jnp.float32) + eps)
    bias = bn_beta.astype(jnp.float32) - bn_mean.astype(jnp.float32) * scale
    pooled = sums.reshape(N, Cin) * (1.0 / float(hw))                        # exact mean
    z = jnp.maximum(pooled @ w2 * scale + bias, 0.0).astype(x.dtype)         # (N, Cout)

    # 1x1 -> HxW interpolate of a constant == broadcast; left to XLA to fuse downstream.
    return jnp.broadcast_to(z[:, :, None, None], (N, Cout, H, W))


def global_pooling_ref(x, conv_w, bn_gamma, bn_beta, bn_mean, bn_var, eps=1e-5):
    """Pure-JAX reference for validation."""
    N, Cin, H, W = x.shape
    Cout = conv_w.shape[0]
    pooled = jnp.mean(x.astype(jnp.float32), axis=(2, 3))                    # (N, Cin)
    y = pooled @ jnp.transpose(conv_w.reshape(Cout, Cin)).astype(jnp.float32)
    scale = bn_gamma / jnp.sqrt(bn_var + eps)
    z = jnp.maximum((y - bn_mean) * scale + bn_beta, 0.0)                    # (N, Cout)
    return jnp.broadcast_to(z[:, :, None, None], (N, Cout, H, W)).astype(x.dtype)


if __name__ == "__main__":
    key = jax.random.PRNGKey(0)

    def run_case(case_key, N, Cin, Cout, H, W, spatial_tile, dtype=jnp.float32,
                 atol=2e-5, rtol=1e-5):
        kx, kw, kg, kb, km, kv = jax.random.split(case_key, 6)
        x = jax.random.normal(kx, (N, Cin, H, W), dtype=jnp.float32).astype(dtype)
        conv_w = jax.random.normal(kw, (Cout, Cin, 1, 1), dtype=jnp.float32) * 0.1
        gamma = 1.0 + 0.1 * jax.random.normal(kg, (Cout,), dtype=jnp.float32)
        beta = 0.1 * jax.random.normal(kb, (Cout,), dtype=jnp.float32)
        mean = 0.05 * jax.random.normal(km, (Cout,), dtype=jnp.float32)
        var = 1.0 + 0.1 * jax.random.uniform(kv, (Cout,), dtype=jnp.float32)

        out = global_pooling_forward(x, conv_w, gamma, beta, mean, var,
                                     spatial_tile=spatial_tile)
        out = jax.block_until_ready(out)
        ref = global_pooling_ref(x, conv_w, gamma, beta, mean, var)
        assert out.shape == (N, Cout, H, W)
        assert jnp.allclose(out.astype(jnp.float32), ref.astype(jnp.float32),
                            atol=atol, rtol=rtol), "mismatch vs reference"

    k1, k2, k3, k4, k5 = jax.random.split(key, 5)
    # Multi-step reduction, spatial extent divides the tile exactly (no masking path).
    run_case(k1, N=2, Cin=4, Cout=8, H=16, W=16, spatial_tile=128)
    # Default (VMEM-budget-derived) tile; single ragged slab, tail-only masking.
    run_case(k2, N=3, Cin=8, Cout=16, H=10, W=10, spatial_tile=None)
    # Multiple full slabs + ragged last slab (tail-only masking).
    run_case(k3, N=2, Cin=16, Cout=8, H=18, W=18, spatial_tile=128)
    # Ragged last slab with full chunks AND a masked tail chunk.
    run_case(k4, N=1, Cin=8, Cout=4, H=22, W=22, spatial_tile=256)
    # bf16 input exercises the per-chunk upcast-into-f32-accumulator path.
    run_case(k5, N=2, Cin=8, Cout=8, H=20, W=20, spatial_tile=128,
             dtype=jnp.bfloat16, atol=2e-2, rtol=2e-2)

    print("KERNEL_OK")
</pallas_src>

<mosaic_0001>
module attributes {stable_mosaic.version = 11 : i64} {
  func.func @_pool_sum_kernel(%arg0: i32, %arg1: i32, %arg2: memref<1x4x128xf32, #tpu.memory_space<vmem>>, %arg3: memref<1x4x1xf32, #tpu.memory_space<vmem>>, %arg4: memref<4x128xf32, #tpu.memory_space<vmem>>) attributes {dimension_semantics = [#tpu.dimension_semantics<parallel>, #tpu.dimension_semantics<arbitrary>], iteration_bounds = array<i64: 2, 2>, scalar_prefetch = 0 : i64, scratch_operands = 1 : i64, tpu.core_type = #tpu.core_type<tc>, window_params = [{transform_indices = @transform_0, window_bounds = array<i64: 1, 4, 128>}, {transform_indices = @transform_1, window_bounds = array<i64: 1, 4, 1>}]} {
    %c0_i32 = arith.constant 0 : i32
    %0 = arith.cmpi eq, %arg1, %c0_i32 : i32
    %1 = arith.extui %0 : i1 to i32
    %c0_i32_0 = arith.constant 0 : i32
    %2 = arith.cmpi ne, %1, %c0_i32_0 : i32
    scf.if %2 {
      %cst = arith.constant 0.000000e+00 : f32
      %14 = vector.broadcast %cst : f32 to vector<4x128xf32>
      %c0_9 = arith.constant 0 : index
      %c0_10 = arith.constant 0 : index
      %15 = vector.load %arg4[%c0_9, %c0_10] : memref<4x128xf32, #tpu.memory_space<vmem>>, vector<4x128xf32>
      tpu.vector_store %arg4[%c0_9, %c0_10], %14 {strides = array<i32>} : memref<4x128xf32, #tpu.memory_space<vmem>>, vector<4x128xf32>,
    } else {
    }
    %c0_i32_1 = arith.constant 0 : i32
    %c128_i32 = arith.constant 128 : i32
    %3 = arith.muli %c0_i32_1, %c128_i32 : i32
    %4 = tpu.assume_multiple %3, 128 : i32
    %c0 = arith.constant 0 : index
    %c0_2 = arith.constant 0 : index
    %5 = vector.load %arg4[%c0, %c0_2] : memref<4x128xf32, #tpu.memory_space<vmem>>, vector<4x128xf32>
    %c0_3 = arith.constant 0 : index
    %c0_4 = arith.constant 0 : index
    %6 = arith.index_cast %4 : i32 to index
    %7 = vector.load %arg2[%c0_3, %c0_4, %6] : memref<1x4x128xf32, #tpu.memory_space<vmem>>, vector<1x4x128xf32>
    %8 = vector.shape_cast %7 : vector<1x4x128xf32> to vector<4x128xf32>
    %9 = arith.addf %5, %8 : vector<4x128xf32>
    %c0_5 = arith.constant 0 : index
    %c0_6 = arith.constant 0 : index
    %10 = vector.load %arg4[%c0_5, %c0_6] : memref<4x128xf32, #tpu.memory_space<vmem>>, vector<4x128xf32>
    tpu.vector_store %arg4[%c0_5, %c0_6], %9 {strides = array<i32>} : memref<4x128xf32, #tpu.memory_space<vmem>>, vector<4x128xf32>,
    %c1_i32 = arith.constant 1 : i32
    %c1_i32_7 = arith.constant 1 : i32
    %11 = arith.cmpi eq, %arg1, %c1_i32_7 : i32
    %12 = arith.extui %11 : i1 to i32
    %c0_i32_8 = arith.constant 0 : i32
    %13 = arith.cmpi ne, %12, %c0_i32_8 : i32
    scf.if %13 {
      %c0_9 = arith.constant 0 : index
      %c0_10 = arith.constant 0 : index
      %14 = vector.load %arg4[%c0_9, %c0_10] : memref<4x128xf32, #tpu.memory_space<vmem>>, vector<4x128xf32>
      %cst = arith.constant dense<0.000000e+00> : vector<4xf32>
      %15 = vector.multi_reduction <add>, %14, %cst [1] : vector<4x128xf32> to vector<4xf32>
      %16 = vector.shape_cast %15 : vector<4xf32> to vector<4x1xf32>
      %17 = vector.shape_cast %16 : vector<4x1xf32> to vector<1x4x1xf32>
      %c0_11 = arith.constant 0 : index
      %c0_12 = arith.constant 0 : index
      %c0_13 = arith.constant 0 : index
      %18 = vector.load %arg3[%c0_11, %c0_12, %c0_13] : memref<1x4x1xf32, #tpu.memory_space<vmem>>, vector<1x4x1xf32>
      tpu.vector_store %arg3[%c0_11, %c0_12, %c0_13], %17 {strides = array<i32>} : memref<1x4x1xf32, #tpu.memory_space<vmem>>, vector<1x4x1xf32>,
    } else {
    }
    return
  }
  func.func @transform_0(%arg0: i32, %arg1: i32) -> (i32, i32, i32) {
    %c0_i32 = arith.constant 0 : i32
    %c0_i32_0 = arith.constant 0 : i32
    return %arg0, %c0_i32, %arg1 : i32, i32, i32
  }
  func.func @transform_1(%arg0: i32, %arg1: i32) -> (i32, i32, i32) {
    %c0_i32 = arith.constant 0 : i32
    %c0_i32_0 = arith.constant 0 : i32
    %c0_i32_1 = arith.constant 0 : i32
    return %arg0, %c0_i32, %c0_i32_0 : i32, i32, i32
  }
}

</mosaic_0001>

<llo_original>
// kernel: tpu_custom_call.1
$region0: #{tpu_custom_call.1}
  #allocation0 [shape = 'u32[]', space=smem, size = 0x4, offset = 0x4, fixed_abs, tag = 'smem constant byte address 0x4 - core index']
  #allocation1 [shape = 'u32[144,128]{1,0:T(1,128)}', space=vmem, size = 0x12000, scoped, tag = 'internal scratch']
  #allocation2 [shape = 'f32[4,128]{1,0:T(4,128)}', space=vmem, size = 0x800, scoped, tag = 'scratch operand']
  %s0 = inlined_call_operand.hbm [shape: f32[2,4,256], index: 0, kind: input, shape index: {}]
  %s1 = inlined_call_operand.vmem [shape: f32[2,4,1], index: 1, kind: output, shape index: {}]
  %s2 = sld [smem:[#allocation0]]
  $region49: #{tpu_custom_call.1} parent=0
    _
  %s4 = ssub.s32 1, %s2
  %s5 = scalar_select 0, %s4, %s2
  $region1: #{tpu_custom_call.1} parent=0
    #allocation3 [shape = 'u8[4096]{0}', space=vmem, size = 0x1000, scoped, tag = 'input window, operand 0']
    #allocation4 [shape = 's32[2]{0}', space=sflag, size = 0x8, scoped, tag = 'scoped memory for tpu_custom_call.1']
    %6 = vsyncpa [#allocation4], 0
    %s7 = scalar_lea.sflag [#allocation4], 1
    %8 = vsyncpa %s7, 0
    loop: start=0, step=1, limit=6
    $region2: #{tpu_custom_call.1} parent=1 // loop_pre_header
      _
    $region3: #{tpu_custom_call.1} parent=1 // loop_header
      %s10 = sphi 0, %s14
      %p11 = scmp.ge.s32.totalorder %s10, 6
      %s17 = sphi 0, %s29
      %s18 = sphi 0, %s25
      %s19 = sphi 0, %s17
      %s20 = sphi 0, %s18
      %s21 = sphi 0, %s19
      %s22 = sphi 0, %s20
      %s34 = sphi 0, %s36
      %s37 = sphi 0, %s34
      %s38 = sphi 0, %s37
      %s54 = sphi 0, %s38
      %s60 = sphi 0, %s62
      %s63 = sphi 0, %s60
      %s64 = sphi 0, %s63
      %s80 = sphi 0, %s64
    $region4: #{tpu_custom_call.1} parent=1 // loop_header_branch
      %13 = sbr.rel (%p11) target = $region8
    $region5: #{tpu_custom_call.1} parent=1 // loop_body
      %s15 = ssub.s32 %s10, 1
      %s16 = ssub.s32 %s10, 2
      %s23 = sadd.s32 1, %s18
      %p24 = scmp.ge.s32.totalorder %s23, 2
      %s25 = scalar_select %p24, 0, %s23
      %s26 = sadd.s32 1, %s17
      %s27 = scalar_select %p24, %s26, %s17
      %p28 = scmp.ge.s32.totalorder %s27, 2
      %s29 = scalar_select %p28, 0, %s27
      %s30 = ssub.s32 %s17, %s29
      %s31 = ssub.s32 %s18, %s25
      %s32 = sor.u32 %s30, %s31
      %p33 = scmp.eq.s32.totalorder %s32, 0
      %s35 = sadd.s32 %s34, 1
      %s36 = scalar_select %p33, %s34, %s35
      %p39 = pneg %p33
      %p40 = scmp.eq.s32.totalorder %s10, 3
      %p41 = por %p39, %p40
      %p42 = scmp.ne.s32.totalorder %s34, %s37
      %p43 = scmp.eq.s32.totalorder %s10, 0
      %p44 = por %p42, %p43
      %p45 = scmp.ne.s32.totalorder %s34, %s37
      %p46 = scmp.eq.s32.totalorder %s15, 3
      %p47 = por %p45, %p46
      %p48 = scmp.ne.s32.totalorder %s37, %s38
      %p49 = scmp.eq.s32.totalorder %s15, 0
      %p50 = por %p48, %p49
      %p51 = scmp.ne.s32.totalorder %s37, %s38
      %p52 = scmp.eq.s32.totalorder %s16, 3
      %p53 = por %p51, %p52
      %p55 = scmp.ne.s32.totalorder %s38, %s54
      %p56 = scmp.eq.s32.totalorder %s16, 0
      %p57 = por %p55, %p56
      %s58 = ssub.s32 %s17, %s29
      %p59 = scmp.eq.s32.totalorder %s58, 0
      %s61 = sadd.s32 %s60, 1
      %s62 = scalar_select %p59, %s60, %s61
      %p65 = pneg %p59
      %p66 = scmp.eq.s32.totalorder %s10, 3
      %p67 = por %p65, %p66
      %p68 = scmp.ne.s32.totalorder %s60, %s63
      %p69 = scmp.eq.s32.totalorder %s10, 0
      %p70 = por %p68, %p69
      %p71 = scmp.ne.s32.totalorder %s60, %s63
      %p72 = scmp.eq.s32.totalorder %s15, 3
      %p73 = por %p71, %p72
      %p74 = scmp.ne.s32.totalorder %s63, %s64
      %p75 = scmp.eq.s32.totalorder %s15, 0
      %p76 = por %p74, %p75
      %p77 = scmp.ne.s32.totalorder %s63, %s64
      %p78 = scmp.eq.s32.totalorder %s16, 3
      %p79 = por %p77, %p78
      %p81 = scmp.ne.s32.totalorder %s64, %s80
      %p82 = scmp.eq.s32.totalorder %s16, 0
      %p83 = por %p81, %p82
      %p84 = scmp.le.s32.totalorder 1, %s10
      %p85 = scmp.lt.s32.totalorder %s10, 5
      %p86 = pnand %p84, %p85
      %p87 = pneg %p86
      // Predicated region
      $region9: #{tpu_custom_call.1} parent=5 // pred_check
        _
      $region10: #{tpu_custom_call.1} parent=5 // pred_check_branch
        %89 = sbr.rel (%p86) target = $region12
      $region11: #{tpu_custom_call.1} parent=5 // pred_region
        %s90 = ssub.s32 %s10, 1
      $region12: #{tpu_custom_call.1} parent=5 // pred_fallthru
        _
      %p91 = scmp.lt.s32.totalorder %s10, 4
      // Predicated region
      $region13: #{tpu_custom_call.1} parent=5 // pred_check
        %p92 = pneg %p91
      $region14: #{tpu_custom_call.1} parent=5 // pred_check_branch
        %94 = sbr.rel (%p92) target = $region16
      $region15: #{tpu_custom_call.1} parent=5 // pred_region
        // Predicated region
        $region17: #{tpu_custom_call.1} parent=15 // pred_check
          %p95 = pneg %p44
        $region18: #{tpu_custom_call.1} parent=15 // pred_check_branch
          %97 = sbr.rel (%p95) target = $region20
        $region19: #{tpu_custom_call.1} parent=15 // pred_region
          %s98 = sand.u32 %s34, 1
          %s99 = scalar_lea.sflag [#allocation4], %s98
          %s100 = sand.u32 %s34, 1
          %s101 = smul.addr %s100, 4
          %s102 = scalar_lea.vmem [#allocation3], %s101
          %s104 = ssub.s32 64, 64
          %105 = vsyncadd %s99, %s104
          %s106 = smul.addr %s17, 2
          %s107 = sadd.s32 %s18, %s106
          %s108 = smul.addr %s107, 64
          %s109 = scalar_lea.hbm %s0, %s108
          %s111 = sshll.u32 %s102, 4
          %s112 = int_to_ptr.vmem [resolvable:$true] %s111
          %114 = dma.hbm_to_vmem [thread:$0]  %s109, 64, %s112, %s99
        $region20: #{tpu_custom_call.1} parent=15 // pred_fallthru
          _
      $region16: #{tpu_custom_call.1} parent=5 // pred_fallthru
        _
      %p115 = scmp.le.s32.totalorder 1, %s10
      %p116 = scmp.lt.s32.totalorder %s10, 5
      %p117 = pnand %p115, %p116
      %p118 = pneg %p117
      // Predicated region
      $region21: #{tpu_custom_call.1} parent=5 // pred_check
        _
      $region22: #{tpu_custom_call.1} parent=5 // pred_check_branch
        %120 = sbr.rel (%p117) target = $region24
      $region23: #{tpu_custom_call.1} parent=5 // pred_region
        %s121 = ssub.s32 %s10, 1
        %s122 = sand.u32 %s37, 1
        %s123 = scalar_lea.sflag [#allocation4], %s122
        %s124 = sand.u32 %s37, 1
        %s125 = smul.addr %s124, 4
        %s126 = scalar_lea.vmem [#allocation3], %s125
        // Predicated region
        $region25: #{tpu_custom_call.1} parent=23 // pred_check
          %p127 = pneg %p50
        $region26: #{tpu_custom_call.1} parent=23 // pred_check_branch
          %129 = sbr.rel (%p127) target = $region28
        $region27: #{tpu_custom_call.1} parent=23 // pred_region
          %130 = dma.done %s123, 64
        $region28: #{tpu_custom_call.1} parent=23 // pred_fallthru
          _
        %s131 = sand.u32 %s37, 1
        %s132 = scalar_lea.sflag [#allocation4], %s131
        %s133 = sand.u32 %s37, 1
        %s134 = smul.addr %s133, 4
        %s135 = scalar_lea.vmem [#allocation3], %s134
        %p136 = pneg %p50
        %p137 = pneg %p47
        %p138 = pneg %p76
        %p139 = pneg %p73
        %p140 = scmp.lt.s32.totalorder %s19, 1
        %s141 = scalar_select %p140, %s19, 1
        %s142 = smul.addr %s141, 4
        %s143 = scalar_lea.vmem %s1, %s142
        %p144 = scmp.lt.s32.totalorder %s19, 1
        %s145 = scalar_select %p144, %s19, 1
        %s146 = smul.addr %s145, 4
        %s147 = scalar_lea.vmem %s1, %s146
        %p148 = scmp.eq.s32.totalorder %s20, 0
        // Predicated region
        $region29: #{tpu_custom_call.1} parent=23 // pred_check
          %p149 = pneg %p148
        $region30: #{tpu_custom_call.1} parent=23 // pred_check_branch
          %151 = sbr.rel (%p149) target = $region32
        $region31: #{tpu_custom_call.1} parent=23 // pred_region
          %152 = vst [vmem:[#allocation2] sm:$0xf] 0.0
        $region32: #{tpu_custom_call.1} parent=23 // pred_fallthru
          _
        %v153 = vld [vmem:[#allocation2] sm:$0xf]
        %v154 = vld [vmem:[%s126] sm:$0xf]
        %v155 = vadd.f32 %v153, %v154
        %156 = vst [vmem:[#allocation2] sm:$0xf] %v155
        %p157 = scmp.eq.s32.totalorder %s20, 1
        // Predicated region
        $region33: #{tpu_custom_call.1} parent=23 // pred_check
          %p158 = pneg %p157
        $region34: #{tpu_custom_call.1} parent=23 // pred_check_branch
          %160 = sbr.rel (%p158) target = $region36
        $region35: #{tpu_custom_call.1} parent=23 // pred_region
          %v161 = vld [vmem:[#allocation2] sm:$0xf]
          %vm162 = vcmask 1043456
          %v163 = vsel %vm162, %v161, 0.0
          %164 = vadd.xlane.f32.xlu0 %v163
          %v165 = vpop.xlane.xlu0 %164
          %vm166 = vcmask 3072
          %167 = vst.msk [vmem:[%s147] sm:$0xf] %vm166, %v165
        $region36: #{tpu_custom_call.1} parent=23 // pred_fallthru
          _
        %p168 = scmp.lt.s32.totalorder %s19, 1
        %s169 = scalar_select %p168, %s19, 1
        %s170 = smul.addr %s169, 4
        %s171 = scalar_lea.vmem %s1, %s170
        // Predicated region
        $region37: #{tpu_custom_call.1} parent=23 // pred_check
          %p172 = pneg %p73
        $region38: #{tpu_custom_call.1} parent=23 // pred_check_branch
          %174 = sbr.rel (%p172) target = $region40
        $region39: #{tpu_custom_call.1} parent=23 // pred_region
          _
        $region40: #{tpu_custom_call.1} parent=23 // pred_fallthru
          _
      $region24: #{tpu_custom_call.1} parent=5 // pred_fallthru
        _
      %p175 = scmp.le.s32.totalorder 2, %s10
      // Predicated region
      $region41: #{tpu_custom_call.1} parent=5 // pred_check
        %p176 = pneg %p175
      $region42: #{tpu_custom_call.1} parent=5 // pred_check_branch
        %178 = sbr.rel (%p176) target = $region44
      $region43: #{tpu_custom_call.1} parent=5 // pred_region
        %s179 = ssub.s32 %s10, 2
        // Predicated region
        $region45: #{tpu_custom_call.1} parent=43 // pred_check
          %p180 = pneg %p79
        $region46: #{tpu_custom_call.1} parent=43 // pred_check_branch
          %182 = sbr.rel (%p180) target = $region48
        $region47: #{tpu_custom_call.1} parent=43 // pred_region
          %p183 = scmp.lt.s32.totalorder %s21, 1
          %s184 = scalar_select %p183, %s21, 1
          %s185 = smul.addr %s184, 4
          %s186 = scalar_lea.vmem %s1, %s185
        $region48: #{tpu_custom_call.1} parent=43 // pred_fallthru
          _
      $region44: #{tpu_custom_call.1} parent=5 // pred_fallthru
        _
    $region6: #{tpu_custom_call.1} parent=1 // loop_footer
      %s14 = sadd.s32 1, %s10
    $region7: #{tpu_custom_call.1} parent=1 // loop_footer_branch
      %9 = sbr.rel target = $region3
    $region8: #{tpu_custom_call.1} parent=1 // loop_exit
      _
    %187 = vsyncpa [#allocation4], 1
    %s188 = scalar_lea.sflag [#allocation4], 1
    %189 = vsyncpa %s188, 1

</llo_original>
